<compile_context>
chip_gen: v7x
topology: tpu7x:2x2x1
jax: 0.10.0
libtpu: 0.0.40
codegen_flags: <defaults>
</compile_context>

<pallas_src>
import jax
import jax.numpy as jnp
from jax.experimental import pallas as pl
from jax.experimental.pallas import tpu as pltpu

_HIDDEN = 16  # widest layer; layers 1..4 are zero-padded to (16, 16)


def _mlp_kernel(x_ref, w0_ref, wstack_ref, bstack_ref, o_ref):
    """Whole forward pass for one batch tile, entirely in VMEM.

    x_ref      : (bt, D)       f32/bf16  activations, natural (batch, feature) layout
    w0_ref     : (16, D)       bf16      first-layer weight (out, in)
    wstack_ref : (4, 16, 16)   bf16      layers 1..4, zero-padded to 16x16
    bstack_ref : (5, 16, 1)    f32       biases, zero-padded to 16 rows
    o_ref      : (1, bt)       f32       sigmoid output (lane-dense, batch on lanes)
    """
    # Tiny in-kernel cast (bt x D elems) puts the only large operand on the
    # MXU's native bf16 path; accumulation stays f32 via preferred_element_type.
    xb = x_ref[...].astype(jnp.bfloat16)                     # (bt, D)

    # Layer 0: contract over D (dim 1 of both operands) -> lane-dense (16, bt).
    # The operand transpose is done on-chip (MXU/XLU slot has huge slack).
    h = jax.lax.dot_general(
        w0_ref[...], xb,
        dimension_numbers=(((1,), (1,)), ((), ())),
        preferred_element_type=jnp.float32)                  # (16, bt) f32
    h = jnp.maximum(h + bstack_ref[0], 0.0)

    # Layers 1..3 (16->8, 8->4, 4->4); zero padding keeps extra rows at 0.
    for j in range(3):
        h = jnp.dot(wstack_ref[j], h.astype(jnp.bfloat16),
                    preferred_element_type=jnp.float32)
        h = jnp.maximum(h + bstack_ref[j + 1], 0.0)          # (16, bt)

    # Layer 4 (4 -> 1) + sigmoid; only row 0 is the real output.
    logits = jnp.dot(wstack_ref[3], h.astype(jnp.bfloat16),
                     preferred_element_type=jnp.float32)
    logits = logits + bstack_ref[4]                          # (16, bt)
    o_ref[...] = jax.nn.sigmoid(logits[0:1, :]).astype(o_ref.dtype)


def _pack_params(params):
    """params: [(W (out,in), b (out,)), ...] in nn.Linear layout.

    Returns (w0, wstack, bstack).  Weights are cast to bf16 once (MXU-native
    operands); biases stay f32.  Layers 1..4 are zero-padded to (16, 16),
    which is exact: padded output rows are 0 before/after ReLU and padded
    input columns multiply those zeros in the next layer.
    """
    w0, b0 = params[0]
    w0 = jnp.asarray(w0, jnp.float32).astype(jnp.bfloat16)
    wstack = jnp.zeros((4, _HIDDEN, _HIDDEN), jnp.float32)
    bstack = jnp.zeros((5, _HIDDEN, 1), jnp.float32)
    bstack = bstack.at[0, : b0.shape[0], 0].set(jnp.asarray(b0, jnp.float32))
    for j, (w, b) in enumerate(params[1:]):
        o, i = w.shape
        wstack = wstack.at[j, :o, :i].set(jnp.asarray(w, jnp.float32))
        bstack = bstack.at[j + 1, :o, 0].set(jnp.asarray(b, jnp.float32))
    return w0, wstack.astype(jnp.bfloat16), bstack


def _round_up(v, m):
    return ((v + m - 1) // m) * m


def _pick_batch_tile(B, D, itemsize, requested=None):
    """Lane width per grid step.

    Targets >= ~0.5-1 MiB of x per step (amortise ~0.35 us per-step overhead),
    keeps >= 2 grid steps when B allows (v7x megacore sharding of the
    "parallel" axis), and caps the double-buffered x tile at ~8 MiB so it
    stays well inside v7x's 32 MiB scoped VMEM default regardless of D.
    """
    if requested is None:
        tile = min(8192, _round_up(max(pl.cdiv(B, 2), 1), 128))
    else:
        tile = requested
    assert tile % 128 == 0, "batch_tile must be a multiple of 128"
    vmem_cap_bytes = 8 << 20
    max_tile = max(128, (vmem_cap_bytes // (2 * D * itemsize)) // 128 * 128)
    return max(128, min(tile, max_tile))


def grasp_success_estimator_forward(x, params, *, batch_tile=None):
    """x: (B, D) float32 (bf16 also accepted; halves x's HBM traffic).
    params: list of (W, b) in nn.Linear (out, in) layout.

    Returns (B, 1) float32 probabilities (matches the PyTorch module).
    No host-side transpose/cast/pad pass is made over x; the ragged last
    batch tile is handled by Pallas edge-block masking.
    """
    B, D = x.shape
    tile = _pick_batch_tile(B, D, x.dtype.itemsize, batch_tile)
    num_tiles = pl.cdiv(B, tile)

    w0, wstack, bstack = _pack_params(params)
    assert w0.shape == (_HIDDEN, D)

    out = pl.pallas_call(
        _mlp_kernel,
        out_shape=jax.ShapeDtypeStruct((1, B), jnp.float32),
        grid_spec=pltpu.PrefetchScalarGridSpec(
            num_scalar_prefetch=0,
            grid=(num_tiles,),
            in_specs=[
                pl.BlockSpec((tile, D), lambda i: (i, 0)),            # x, natural layout
                pl.BlockSpec((_HIDDEN, D), lambda i: (0, 0)),         # w0 (resident)
                pl.BlockSpec((4, _HIDDEN, _HIDDEN), lambda i: (0, 0, 0)),
                pl.BlockSpec((5, _HIDDEN, 1), lambda i: (0, 0, 0)),
            ],
            out_specs=pl.BlockSpec((1, tile), lambda i: (0, i)),      # lane-dense output
        ),
        compiler_params=pltpu.CompilerParams(
            dimension_semantics=("parallel",)),  # batch tiles shard across TCs (v7x)
    )(x, w0, wstack, bstack)

    # (1, B) -> (B, 1): same contiguous data, free reshape.
    return out.reshape(B, 1)


def init_params(key, input_shape):
    """Deterministic synthetic parameters in nn.Linear layout: W (out, in), b (out,)."""
    dims = [input_shape, 16, 8, 4, 4, 1]
    params = []
    for i in range(len(dims) - 1):
        key, kw, kb = jax.random.split(key, 3)
        fan_in = dims[i]
        bound = 1.0 / (fan_in ** 0.5)
        w = jax.random.uniform(kw, (dims[i + 1], dims[i]),
                               minval=-bound, maxval=bound, dtype=jnp.float32)
        b = jax.random.uniform(kb, (dims[i + 1],),
                               minval=-bound, maxval=bound, dtype=jnp.float32)
        params.append((w, b))
    return params


def reference_forward(x, params):
    """Pure-JAX f32 reference of the PyTorch forward (x @ W.T + b per layer)."""
    h = x
    for i, (w, b) in enumerate(params):
        h = jnp.dot(h, w.T, precision=jax.lax.Precision.HIGHEST) + b
        if i < len(params) - 1:
            h = jnp.maximum(h, 0.0)
        else:
            h = jax.nn.sigmoid(h)
    return h


if __name__ == "__main__":
    key = jax.random.PRNGKey(0)
    key, kx = jax.random.split(key)

    batch = 300           # NOT a multiple of 128 -> exercises the ragged edge block
    input_shape = 32      # the module's `input_shape` constructor argument

    x = jax.random.normal(kx, (batch, input_shape), dtype=jnp.float32)
    params = init_params(key, input_shape)

    out = grasp_success_estimator_forward(x, params)
    out = jax.block_until_ready(out)

    ref = reference_forward(x, params)

    assert out.shape == (batch, 1)
    # Kernel uses bf16 matmul operands with f32 accumulation -> ~1e-3 logit
    # noise, ~3e-4 on the sigmoid output; 3e-3 tolerance is comfortable.
    assert jnp.allclose(out, ref, atol=3e-3, rtol=3e-3), "mismatch vs reference"

    print("KERNEL_OK")
</pallas_src>

<mosaic_0001>
module attributes {stable_mosaic.version = 11 : i64} {
  func.func @_mlp_kernel(%arg0: i32, %arg1: memref<256x32xf32, #tpu.memory_space<vmem>>, %arg2: memref<16x32xbf16, #tpu.memory_space<vmem>>, %arg3: memref<4x16x16xbf16, #tpu.memory_space<vmem>>, %arg4: memref<5x16x1xf32, #tpu.memory_space<vmem>>, %arg5: memref<1x256xf32, #tpu.memory_space<vmem>>) attributes {dimension_semantics = [#tpu.dimension_semantics<parallel>], iteration_bounds = array<i64: 2>, scalar_prefetch = 0 : i64, scratch_operands = 0 : i64, tpu.core_type = #tpu.core_type<tc>, window_params = [{transform_indices = @transform_0, window_bounds = array<i64: 256, 32>}, {pipeline_mode = #tpu.pipeline_mode<synchronous>, transform_indices = @transform_1, window_bounds = array<i64: 16, 32>}, {pipeline_mode = #tpu.pipeline_mode<synchronous>, transform_indices = @transform_2, window_bounds = array<i64: 4, 16, 16>}, {pipeline_mode = #tpu.pipeline_mode<synchronous>, transform_indices = @transform_3, window_bounds = array<i64: 5, 16, 1>}, {transform_indices = @transform_4, window_bounds = array<i64: 1, 256>}]} {
    %c0 = arith.constant 0 : index
    %c0_0 = arith.constant 0 : index
    %0 = vector.load %arg1[%c0, %c0_0] : memref<256x32xf32, #tpu.memory_space<vmem>>, vector<256x32xf32>
    %1 = arith.truncf %0 : vector<256x32xf32> to vector<256x32xbf16>
    %c0_1 = arith.constant 0 : index
    %c0_2 = arith.constant 0 : index
    %2 = vector.load %arg2[%c0_1, %c0_2] : memref<16x32xbf16, #tpu.memory_space<vmem>>, vector<16x32xbf16>
    %cst = arith.constant dense<0.000000e+00> : vector<16x256xf32>
    %3 = tpu.matmul %2, %1, %cst {dimension_numbers = #tpu.dot_dimension_numbers<[1], [1], [0], [0], [0, 0, 1, 0], [], []>} : vector<16x32xbf16>, vector<256x32xbf16>, vector<16x256xf32> -> vector<16x256xf32>
    %c0_3 = arith.constant 0 : index
    %c0_4 = arith.constant 0 : index
    %c0_5 = arith.constant 0 : index
    %4 = vector.load %arg4[%c0_3, %c0_4, %c0_5] : memref<5x16x1xf32, #tpu.memory_space<vmem>>, vector<1x16x1xf32>
    %5 = vector.shape_cast %4 : vector<1x16x1xf32> to vector<16x1xf32>
    %6 = vector.broadcast %5 : vector<16x1xf32> to vector<16x256xf32>
    %7 = arith.addf %3, %6 : vector<16x256xf32>
    %cst_6 = arith.constant 0.000000e+00 : f32
    %8 = vector.broadcast %cst_6 : f32 to vector<16x256xf32>
    %9 = arith.maximumf %7, %8 : vector<16x256xf32>
    %c0_7 = arith.constant 0 : index
    %c0_8 = arith.constant 0 : index
    %c0_9 = arith.constant 0 : index
    %10 = vector.load %arg3[%c0_7, %c0_8, %c0_9] : memref<4x16x16xbf16, #tpu.memory_space<vmem>>, vector<1x16x16xbf16>
    %11 = vector.shape_cast %10 : vector<1x16x16xbf16> to vector<16x16xbf16>
    %12 = arith.truncf %9 : vector<16x256xf32> to vector<16x256xbf16>
    %cst_10 = arith.constant dense<0.000000e+00> : vector<16x256xf32>
    %13 = tpu.matmul %11, %12, %cst_10 {dimension_numbers = #tpu.dot_dimension_numbers<[1], [0], [0], [1], [0, 0, 1, 1], [], []>} : vector<16x16xbf16>, vector<16x256xbf16>, vector<16x256xf32> -> vector<16x256xf32>
    %c1 = arith.constant 1 : index
    %c0_11 = arith.constant 0 : index
    %c0_12 = arith.constant 0 : index
    %14 = vector.load %arg4[%c1, %c0_11, %c0_12] : memref<5x16x1xf32, #tpu.memory_space<vmem>>, vector<1x16x1xf32>
    %15 = vector.shape_cast %14 : vector<1x16x1xf32> to vector<16x1xf32>
    %16 = vector.broadcast %15 : vector<16x1xf32> to vector<16x256xf32>
    %17 = arith.addf %13, %16 : vector<16x256xf32>
    %cst_13 = arith.constant 0.000000e+00 : f32
    %18 = vector.broadcast %cst_13 : f32 to vector<16x256xf32>
    %19 = arith.maximumf %17, %18 : vector<16x256xf32>
    %c1_14 = arith.constant 1 : index
    %c0_15 = arith.constant 0 : index
    %c0_16 = arith.constant 0 : index
    %20 = vector.load %arg3[%c1_14, %c0_15, %c0_16] : memref<4x16x16xbf16, #tpu.memory_space<vmem>>, vector<1x16x16xbf16>
    %21 = vector.shape_cast %20 : vector<1x16x16xbf16> to vector<16x16xbf16>
    %22 = arith.truncf %19 : vector<16x256xf32> to vector<16x256xbf16>
    %cst_17 = arith.constant dense<0.000000e+00> : vector<16x256xf32>
    %23 = tpu.matmul %21, %22, %cst_17 {dimension_numbers = #tpu.dot_dimension_numbers<[1], [0], [0], [1], [0, 0, 1, 1], [], []>} : vector<16x16xbf16>, vector<16x256xbf16>, vector<16x256xf32> -> vector<16x256xf32>
    %c2 = arith.constant 2 : index
    %c0_18 = arith.constant 0 : index
    %c0_19 = arith.constant 0 : index
    %24 = vector.load %arg4[%c2, %c0_18, %c0_19] : memref<5x16x1xf32, #tpu.memory_space<vmem>>, vector<1x16x1xf32>
    %25 = vector.shape_cast %24 : vector<1x16x1xf32> to vector<16x1xf32>
    %26 = vector.broadcast %25 : vector<16x1xf32> to vector<16x256xf32>
    %27 = arith.addf %23, %26 : vector<16x256xf32>
    %cst_20 = arith.constant 0.000000e+00 : f32
    %28 = vector.broadcast %cst_20 : f32 to vector<16x256xf32>
    %29 = arith.maximumf %27, %28 : vector<16x256xf32>
    %c2_21 = arith.constant 2 : index
    %c0_22 = arith.constant 0 : index
    %c0_23 = arith.constant 0 : index
    %30 = vector.load %arg3[%c2_21, %c0_22, %c0_23] : memref<4x16x16xbf16, #tpu.memory_space<vmem>>, vector<1x16x16xbf16>
    %31 = vector.shape_cast %30 : vector<1x16x16xbf16> to vector<16x16xbf16>
    %32 = arith.truncf %29 : vector<16x256xf32> to vector<16x256xbf16>
    %cst_24 = arith.constant dense<0.000000e+00> : vector<16x256xf32>
    %33 = tpu.matmul %31, %32, %cst_24 {dimension_numbers = #tpu.dot_dimension_numbers<[1], [0], [0], [1], [0, 0, 1, 1], [], []>} : vector<16x16xbf16>, vector<16x256xbf16>, vector<16x256xf32> -> vector<16x256xf32>
    %c3 = arith.constant 3 : index
    %c0_25 = arith.constant 0 : index
    %c0_26 = arith.constant 0 : index
    %34 = vector.load %arg4[%c3, %c0_25, %c0_26] : memref<5x16x1xf32, #tpu.memory_space<vmem>>, vector<1x16x1xf32>
    %35 = vector.shape_cast %34 : vector<1x16x1xf32> to vector<16x1xf32>
    %36 = vector.broadcast %35 : vector<16x1xf32> to vector<16x256xf32>
    %37 = arith.addf %33, %36 : vector<16x256xf32>
    %cst_27 = arith.constant 0.000000e+00 : f32
    %38 = vector.broadcast %cst_27 : f32 to vector<16x256xf32>
    %39 = arith.maximumf %37, %38 : vector<16x256xf32>
    %c3_28 = arith.constant 3 : index
    %c0_29 = arith.constant 0 : index
    %c0_30 = arith.constant 0 : index
    %40 = vector.load %arg3[%c3_28, %c0_29, %c0_30] : memref<4x16x16xbf16, #tpu.memory_space<vmem>>, vector<1x16x16xbf16>
    %41 = vector.shape_cast %40 : vector<1x16x16xbf16> to vector<16x16xbf16>
    %42 = arith.truncf %39 : vector<16x256xf32> to vector<16x256xbf16>
    %cst_31 = arith.constant dense<0.000000e+00> : vector<16x256xf32>
    %43 = tpu.matmul %41, %42, %cst_31 {dimension_numbers = #tpu.dot_dimension_numbers<[1], [0], [0], [1], [0, 0, 1, 1], [], []>} : vector<16x16xbf16>, vector<16x256xbf16>, vector<16x256xf32> -> vector<16x256xf32>
    %c4 = arith.constant 4 : index
    %c0_32 = arith.constant 0 : index
    %c0_33 = arith.constant 0 : index
    %44 = vector.load %arg4[%c4, %c0_32, %c0_33] : memref<5x16x1xf32, #tpu.memory_space<vmem>>, vector<1x16x1xf32>
    %45 = vector.shape_cast %44 : vector<1x16x1xf32> to vector<16x1xf32>
    %46 = vector.broadcast %45 : vector<16x1xf32> to vector<16x256xf32>
    %47 = arith.addf %43, %46 : vector<16x256xf32>
    %48 = vector.extract_strided_slice %47 {offsets = [0, 0], sizes = [1, 256], strides = [1, 1]} : vector<16x256xf32> to vector<1x256xf32>
    %49 = arith.negf %48 : vector<1x256xf32>
    %50 = math.exp %49 : vector<1x256xf32>
    %cst_34 = arith.constant 1.000000e+00 : f32
    %51 = vector.broadcast %cst_34 : f32 to vector<1x256xf32>
    %52 = arith.addf %51, %50 : vector<1x256xf32>
    %53 = arith.divf %51, %52 : vector<1x256xf32>
    %c0_35 = arith.constant 0 : index
    %c0_36 = arith.constant 0 : index
    %54 = vector.load %arg5[%c0_35, %c0_36] : memref<1x256xf32, #tpu.memory_space<vmem>>, vector<1x256xf32>
    tpu.vector_store %arg5[%c0_35, %c0_36], %53 {strides = array<i32>} : memref<1x256xf32, #tpu.memory_space<vmem>>, vector<1x256xf32>,
    return
  }
  func.func @transform_0(%arg0: i32) -> (i32, i32) {
    %c0_i32 = arith.constant 0 : i32
    %c0_i32_0 = arith.constant 0 : i32
    return %arg0, %c0_i32 : i32, i32
  }
  func.func @transform_1(%arg0: i32) -> (i32, i32) {
    %c0_i32 = arith.constant 0 : i32
    %c0_i32_0 = arith.constant 0 : i32
    %c0_i32_1 = arith.constant 0 : i32
    return %c0_i32, %c0_i32_0 : i32, i32
  }
  func.func @transform_2(%arg0: i32) -> (i32, i32, i32) {
    %c0_i32 = arith.constant 0 : i32
    %c0_i32_0 = arith.constant 0 : i32
    %c0_i32_1 = arith.constant 0 : i32
    %c0_i32_2 = arith.constant 0 : i32
    return %c0_i32, %c0_i32_0, %c0_i32_1 : i32, i32, i32
  }
  func.func @transform_3(%arg0: i32) -> (i32, i32, i32) {
    %c0_i32 = arith.constant 0 : i32
    %c0_i32_0 = arith.constant 0 : i32
    %c0_i32_1 = arith.constant 0 : i32
    %c0_i32_2 = arith.constant 0 : i32
    return %c0_i32, %c0_i32_0, %c0_i32_1 : i32, i32, i32
  }
  func.func @transform_4(%arg0: i32) -> (i32, i32) {
    %c0_i32 = arith.constant 0 : i32
    %c0_i32_0 = arith.constant 0 : i32
    return %c0_i32, %arg0 : i32, i32
  }
}

</mosaic_0001>

<llo_original>
// kernel: tpu_custom_call.1
$region0: #{tpu_custom_call.1}
  #allocation0 [shape = 'u32[]', space=smem, size = 0x4, offset = 0x4, fixed_abs, tag = 'smem constant byte address 0x4 - core index']
  #allocation1 [shape = 'u32[144,128]{1,0:T(1,128)}', space=vmem, size = 0x12000, scoped, tag = 'internal scratch']
  %s0 = inlined_call_operand.vmem [shape: f32[300,32], index: 0, kind: input, shape index: {}]
  %s1 = inlined_call_operand.vmem [shape: bf16[16,32], index: 1, kind: input, shape index: {}]
  %s2 = inlined_call_operand.vmem [shape: bf16[4,16,16], index: 2, kind: input, shape index: {}]
  %s3 = inlined_call_operand.vmem [shape: f32[5,16,1], index: 3, kind: input, shape index: {}]
  %s4 = inlined_call_operand.hbm [shape: f32[1,300], index: 4, kind: output, shape index: {}]
  %s5 = sld [smem:[#allocation0]]
  $region49: #{tpu_custom_call.1} parent=0
    _
  %s7 = ssub.s32 1, %s5
  %s8 = scalar_select 0, %s7, %s5
  $region1: #{tpu_custom_call.1} parent=0
    #allocation2 [shape = 'u8[2048]{0}', space=vmem, size = 0x800, scoped, tag = 'output window, operand 0']
    #allocation3 [shape = 's32[2]{0}', space=sflag, size = 0x8, scoped, tag = 'scoped memory for tpu_custom_call.1']
    %9 = vsyncpa [#allocation3], 0
    %s10 = scalar_lea.sflag [#allocation3], 1
    %11 = vsyncpa %s10, 0
    loop: start=0, step=1, limit=4
    $region2: #{tpu_custom_call.1} parent=1 // loop_pre_header
      _
    $region3: #{tpu_custom_call.1} parent=1 // loop_header
      %s13 = sphi 0, %s17
      %p14 = scmp.ge.s32.totalorder %s13, 4
      %s23 = sphi 0, %s25
      %s26 = sphi 0, %s23
      %s27 = sphi 0, %s26
      %s43 = sphi 0, %s27
      %s47 = sphi 0, %s47
      %s49 = sphi 0, %s47
      %s50 = sphi 0, %s49
      %s64 = sphi 0, %s50
      %s68 = sphi 0, %s68
      %s70 = sphi 0, %s68
      %s71 = sphi 0, %s70
      %s85 = sphi 0, %s71
      %s89 = sphi 0, %s89
      %s91 = sphi 0, %s89
      %s92 = sphi 0, %s91
      %s106 = sphi 0, %s92
      %s112 = sphi 0, %s114
      %s115 = sphi 0, %s112
      %s116 = sphi 0, %s115
      %s132 = sphi 0, %s116
    $region4: #{tpu_custom_call.1} parent=1 // loop_header_branch
      %16 = sbr.rel (%p14) target = $region8
    $region5: #{tpu_custom_call.1} parent=1 // loop_body
      %s18 = ssub.s32 %s13, 1
      %s19 = ssub.s32 %s13, 2
      %s20 = sadd.s32 %s13, 1
      %s21 = ssub.s32 %s13, %s20
      %p22 = scmp.eq.s32.totalorder %s21, 0
      %s24 = sadd.s32 %s23, 1
      %s25 = scalar_select %p22, %s23, %s24
      %p28 = pneg %p22
      %p29 = scmp.eq.s32.totalorder %s13, 1
      %p30 = por %p28, %p29
      %p31 = scmp.ne.s32.totalorder %s23, %s26
      %p32 = scmp.eq.s32.totalorder %s13, 0
      %p33 = por %p31, %p32
      %p34 = scmp.ne.s32.totalorder %s23, %s26
      %p35 = scmp.eq.s32.totalorder %s18, 1
      %p36 = por %p34, %p35
      %p37 = scmp.ne.s32.totalorder %s26, %s27
      %p38 = scmp.eq.s32.totalorder %s18, 0
      %p39 = por %p37, %p38
      %p40 = scmp.ne.s32.totalorder %s26, %s27
      %p41 = scmp.eq.s32.totalorder %s19, 1
      %p42 = por %p40, %p41
      %p44 = scmp.ne.s32.totalorder %s27, %s43
      %p45 = scmp.eq.s32.totalorder %s19, 0
      %p46 = por %p44, %p45
      %s48 = sadd.s32 %s47, 1
      %p51 = scmp.eq.s32.totalorder %s13, 1
      %p52 = scmp.ne.s32.totalorder %s47, %s49
      %p53 = scmp.eq.s32.totalorder %s13, 0
      %p54 = por %p52, %p53
      %p55 = scmp.ne.s32.totalorder %s47, %s49
      %p56 = scmp.eq.s32.totalorder %s18, 1
      %p57 = por %p55, %p56
      %p58 = scmp.ne.s32.totalorder %s49, %s50
      %p59 = scmp.eq.s32.totalorder %s18, 0
      %p60 = por %p58, %p59
      %p61 = scmp.ne.s32.totalorder %s49, %s50
      %p62 = scmp.eq.s32.totalorder %s19, 1
      %p63 = por %p61, %p62
      %p65 = scmp.ne.s32.totalorder %s50, %s64
      %p66 = scmp.eq.s32.totalorder %s19, 0
      %p67 = por %p65, %p66
      %s69 = sadd.s32 %s68, 1
      %p72 = scmp.eq.s32.totalorder %s13, 1
      %p73 = scmp.ne.s32.totalorder %s68, %s70
      %p74 = scmp.eq.s32.totalorder %s13, 0
      %p75 = por %p73, %p74
      %p76 = scmp.ne.s32.totalorder %s68, %s70
      %p77 = scmp.eq.s32.totalorder %s18, 1
      %p78 = por %p76, %p77
      %p79 = scmp.ne.s32.totalorder %s70, %s71
      %p80 = scmp.eq.s32.totalorder %s18, 0
      %p81 = por %p79, %p80
      %p82 = scmp.ne.s32.totalorder %s70, %s71
      %p83 = scmp.eq.s32.totalorder %s19, 1
      %p84 = por %p82, %p83
      %p86 = scmp.ne.s32.totalorder %s71, %s85
      %p87 = scmp.eq.s32.totalorder %s19, 0
      %p88 = por %p86, %p87
      %s90 = sadd.s32 %s89, 1
      %p93 = scmp.eq.s32.totalorder %s13, 1
      %p94 = scmp.ne.s32.totalorder %s89, %s91
      %p95 = scmp.eq.s32.totalorder %s13, 0
      %p96 = por %p94, %p95
      %p97 = scmp.ne.s32.totalorder %s89, %s91
      %p98 = scmp.eq.s32.totalorder %s18, 1
      %p99 = por %p97, %p98
      %p100 = scmp.ne.s32.totalorder %s91, %s92
      %p101 = scmp.eq.s32.totalorder %s18, 0
      %p102 = por %p100, %p101
      %p103 = scmp.ne.s32.totalorder %s91, %s92
      %p104 = scmp.eq.s32.totalorder %s19, 1
      %p105 = por %p103, %p104
      %p107 = scmp.ne.s32.totalorder %s92, %s106
      %p108 = scmp.eq.s32.totalorder %s19, 0
      %p109 = por %p107, %p108
      %s110 = ssub.s32 %s13, %s20
      %p111 = scmp.eq.s32.totalorder %s110, 0
      %s113 = sadd.s32 %s112, 1
      %s114 = scalar_select %p111, %s112, %s113
      %p117 = pneg %p111
      %p118 = scmp.eq.s32.totalorder %s13, 1
      %p119 = por %p117, %p118
      %p120 = scmp.ne.s32.totalorder %s112, %s115
      %p121 = scmp.eq.s32.totalorder %s13, 0
      %p122 = por %p120, %p121
      %p123 = scmp.ne.s32.totalorder %s112, %s115
      %p124 = scmp.eq.s32.totalorder %s18, 1
      %p125 = por %p123, %p124
      %p126 = scmp.ne.s32.totalorder %s115, %s116
      %p127 = scmp.eq.s32.totalorder %s18, 0
      %p128 = por %p126, %p127
      %p129 = scmp.ne.s32.totalorder %s115, %s116
      %p130 = scmp.eq.s32.totalorder %s19, 1
      %p131 = por %p129, %p130
      %p133 = scmp.ne.s32.totalorder %s116, %s132
      %p134 = scmp.eq.s32.totalorder %s19, 0
      %p135 = por %p133, %p134
      %p136 = scmp.le.s32.totalorder 1, %s13
      %p137 = scmp.lt.s32.totalorder %s13, 3
      %p138 = pnand %p136, %p137
      %p139 = pneg %p138
      // Predicated region
      $region9: #{tpu_custom_call.1} parent=5 // pred_check
        _
      $region10: #{tpu_custom_call.1} parent=5 // pred_check_branch
        %141 = sbr.rel (%p138) target = $region12
      $region11: #{tpu_custom_call.1} parent=5 // pred_region
        %s142 = ssub.s32 %s13, 1
        // Predicated region
        $region13: #{tpu_custom_call.1} parent=11 // pred_check
          %p143 = pneg %p60
        $region14: #{tpu_custom_call.1} parent=11 // pred_check_branch
          %145 = sbr.rel (%p143) target = $region16
        $region15: #{tpu_custom_call.1} parent=11 // pred_region
          _
        $region16: #{tpu_custom_call.1} parent=11 // pred_fallthru
          _
        // Predicated region
        $region17: #{tpu_custom_call.1} parent=11 // pred_check
          %p146 = pneg %p81
        $region18: #{tpu_custom_call.1} parent=11 // pred_check_branch
          %148 = sbr.rel (%p146) target = $region20
        $region19: #{tpu_custom_call.1} parent=11 // pred_region
          _
        $region20: #{tpu_custom_call.1} parent=11 // pred_fallthru
          _
        // Predicated region
        $region21: #{tpu_custom_call.1} parent=11 // pred_check
          %p149 = pneg %p102
        $region22: #{tpu_custom_call.1} parent=11 // pred_check_branch
          %151 = sbr.rel (%p149) target = $region24
        $region23: #{tpu_custom_call.1} parent=11 // pred_region
          _
        $region24: #{tpu_custom_call.1} parent=11 // pred_fallthru
          _
      $region12: #{tpu_custom_call.1} parent=5 // pred_fallthru
        _
      %p152 = scmp.lt.s32.totalorder %s13, 2
      // Predicated region
      $region25: #{tpu_custom_call.1} parent=5 // pred_check
        %p153 = pneg %p152
      $region26: #{tpu_custom_call.1} parent=5 // pred_check_branch
        %155 = sbr.rel (%p153) target = $region28
      $region27: #{tpu_custom_call.1} parent=5 // pred_region
        // Predicated region
        $region29: #{tpu_custom_call.1} parent=27 // pred_check
          %p156 = pneg %p33
        $region30: #{tpu_custom_call.1} parent=27 // pred_check_branch
          %158 = sbr.rel (%p156) target = $region32
        $region31: #{tpu_custom_call.1} parent=27 // pred_region
          %s159 = smul.u32 32, %s13
          %s160 = ssub.s32 38, %s159
          %p161 = scmp.lt.s32.totalorder %s160, 32
          %s162 = scalar_select %p161, %s160, 32
          %s163 = smul.u32 128, %s162
          %p164 = scmp.lt.s32.totalorder %s159, 37
          %s165 = scalar_select %p164, %s159, 37
          %s166 = smul.addr %s165, 8
          %s167 = scalar_lea.vmem %s0, %s166
          %s168 = smul.u32 32, %s13
          %s169 = ssub.s32 38, %s168
          %p170 = scmp.lt.s32.totalorder %s169, 32
          %s171 = scalar_select %p170, %s169, 32
          %s172 = smul.u32 128, %s171
        $region32: #{tpu_custom_call.1} parent=27 // pred_fallthru
          _
      $region28: #{tpu_custom_call.1} parent=5 // pred_fallthru
        _
      %p173 = scmp.le.s32.totalorder 1, %s13
      %p174 = scmp.lt.s32.totalorder %s13, 3
      %p175 = pnand %p173, %p174
      %p176 = pneg %p175
      // Predicated region
      $region33: #{tpu_custom_call.1} parent=5 // pred_check
        _
      $region34: #{tpu_custom_call.1} parent=5 // pred_check_branch
        %178 = sbr.rel (%p175) target = $region36
      $region35: #{tpu_custom_call.1} parent=5 // pred_region
        %s179 = ssub.s32 %s13, 1
        %s180 = smul.u32 32, %s18
        %s181 = ssub.s32 38, %s180
        %p182 = scmp.lt.s32.totalorder %s181, 32
        %s183 = scalar_select %p182, %s181, 32
        %s184 = smul.u32 128, %s183
        %p185 = scmp.lt.s32.totalorder %s180, 37
        %s186 = scalar_select %p185, %s180, 37
        %s187 = smul.addr %s186, 8
        %s188 = scalar_lea.vmem %s0, %s187
        %p189 = pneg %p39
        %p190 = pneg %p36
        %p191 = pneg %p60
        %p192 = pneg %p57
        %p193 = pneg %p81
        %p194 = pneg %p78
        %p195 = pneg %p102
        %p196 = pneg %p99
        %p197 = pneg %p128
        %p198 = pneg %p125
        %s199 = sand.u32 %s115, 1
        %s200 = scalar_lea.sflag [#allocation3], %s199
        %s201 = sand.u32 %s115, 1
        %s202 = smul.addr %s201, 2
        %s203 = scalar_lea.vmem [#allocation2], %s202
        %s204 = smul.u32 32, %s18
        %s205 = ssub.s32 38, %s204
        %p206 = scmp.lt.s32.totalorder %s205, 32
        %s207 = scalar_select %p206, %s205, 32
        %s208 = smul.u32 128, %s207
        %p209 = scmp.lt.s32.totalorder %s204, 37
        %s210 = scalar_select %p209, %s204, 37
        %s211 = smul.addr %s210, 8
        %s212 = scalar_lea.vmem %s0, %s211
        %s213 = smul.u32 32, %s18
        %s214 = ssub.s32 38, %s213
        %p215 = scmp.lt.s32.totalorder %s214, 32
        %s216 = scalar_select %p215, %s214, 32
        %s217 = smul.u32 128, %s216
        %s218 = smul.u32 2, %s18
        %s219 = ssub.s32 3, %s218
        %p220 = scmp.lt.s32.totalorder %s219, 2
        %s221 = scalar_select %p220, %s219, 2
        %s222 = smul.u32 16, %s221
        %v224 = vld [vmem:[%s212] sm:$0xff]
        %v225 = vld [vmem:[%s212 + $0x8] sm:$0xff]
        %v226 = vld [vmem:[%s212 + $0x10] sm:$0xff]
        %v227 = vld [vmem:[%s212 + $0x18] sm:$0xff]
        %v228 = vld [vmem:[%s212 + $0x20] sm:$0xff]
        %v229 = vld [vmem:[%s212 + $0x28] sm:$0xff]
        %v230 = vld [vmem:[%s212 + $0x30] sm:$0xff]
        %v231 = vld [vmem:[%s212 + $0x38] sm:$0xff]
        %v232 = vld [vmem:[%s212 + $0x40] sm:$0xff]
        %v233 = vld [vmem:[%s212 + $0x48] sm:$0xff]
        %v234 = vld [vmem:[%s212 + $0x50] sm:$0xff]
        %v235 = vld [vmem:[%s212 + $0x58] sm:$0xff]
        %v236 = vld [vmem:[%s212 + $0x60] sm:$0xff]
        %v237 = vld [vmem:[%s212 + $0x68] sm:$0xff]
        %v238 = vld [vmem:[%s212 + $0x70] sm:$0xff]
        %v239 = vld [vmem:[%s212 + $0x78] sm:$0xff]
        %v240 = vld [vmem:[%s212 + $0x80] sm:$0xff]
        %v241 = vld [vmem:[%s212 + $0x88] sm:$0xff]
        %v242 = vld [vmem:[%s212 + $0x90] sm:$0xff]
        %v243 = vld [vmem:[%s212 + $0x98] sm:$0xff]
        %v244 = vld [vmem:[%s212 + $0xa0] sm:$0xff]
        %v245 = vld [vmem:[%s212 + $0xa8] sm:$0xff]
        %v246 = vld [vmem:[%s212 + $0xb0] sm:$0xff]
        %v247 = vld [vmem:[%s212 + $0xb8] sm:$0xff]
        %v248 = vld [vmem:[%s212 + $0xc0] sm:$0xff]
        %v249 = vld [vmem:[%s212 + $0xc8] sm:$0xff]
        %v250 = vld [vmem:[%s212 + $0xd0] sm:$0xff]
        %v251 = vld [vmem:[%s212 + $0xd8] sm:$0xff]
        %v252 = vld [vmem:[%s212 + $0xe0] sm:$0xff]
        %v253 = vld [vmem:[%s212 + $0xe8] sm:$0xff]
        %v254 = vld [vmem:[%s212 + $0xf0] sm:$0xff]
        %v255 = vld [vmem:[%s212 + $0xf8] sm:$0xff]
        %v256 = vpack.c.bf16 %v225, %v224
        %v257 = vpack.c.bf16 %v227, %v226
        %v258 = vpack.c.bf16 %v229, %v228
        %v259 = vpack.c.bf16 %v231, %v230
        %v260 = vpack.c.bf16 %v233, %v232
        %v261 = vpack.c.bf16 %v235, %v234
        %v262 = vpack.c.bf16 %v237, %v236
        %v263 = vpack.c.bf16 %v239, %v238
        %v264 = vpack.c.bf16 %v241, %v240
        %v265 = vpack.c.bf16 %v243, %v242
        %v266 = vpack.c.bf16 %v245, %v244
        %v267 = vpack.c.bf16 %v247, %v246
        %v268 = vpack.c.bf16 %v249, %v248
        %v269 = vpack.c.bf16 %v251, %v250
        %v270 = vpack.c.bf16 %v253, %v252
        %v271 = vpack.c.bf16 %v255, %v254
        %v272 = vld [vmem:[%s1] sm:$0xf]
        %v273 = vld [vmem:[%s1 + $0x4] sm:$0xf]
        %v274 = vld [vmem:[%s3] sm:$0xff]
        %v275 = vld [vmem:[%s3 + $0x8] sm:$0xff]
        %277 = vset.pattern.permute.xlu0 0
        %278 = vperm.xlu0 %277, %v274
        %v279 = vpop.permute.xlu0 %278
        %282 = vset.pattern.permute.xlu0 0
        %283 = vperm.xlu0 %282, %v275
        %v284 = vpop.permute.xlu0 %283
        %v288 = vunpack.c.l.b16 %v272
        %v289 = vunpack.c.l.b16 %v273
        %v290 = vpack.c.b16 %v289, %v288
        %vm291 = vcmask 261120
        %v293 = vsel %vm291, %v290, 0
        %v296 = vsel %vm291, %v256, 0
        %v299 = vsel %vm291, %v257, 0
        %v302 = vsel %vm291, %v258, 0
        %v305 = vsel %vm291, %v259, 0
        %v308 = vsel %vm291, %v260, 0
        %v311 = vsel %vm291, %v261, 0
        %v314 = vsel %vm291, %v262, 0
        %v317 = vsel %vm291, %v263, 0
        %v320 = vsel %vm291, %v264, 0
        %v323 = vsel %vm291, %v265, 0
        %v326 = vsel %vm291, %v266, 0
        %v329 = vsel %vm291, %v267, 0
        %v332 = vsel %vm291, %v268, 0
        %v335 = vsel %vm291, %v269, 0
        %v338 = vsel %vm291, %v270, 0
        %v341 = vsel %vm291, %v271, 0
        %343 = vmatprep.subr.bf16.mxu0 0
        %344 = vmatpush1.bf16.xpose.msra.mxu0 %v296
        %345 = vmatprep.subr.bf16.mxu0 0
        %346 = vmatpush1.bf16.xpose.msra.mxu0 %v299
        %347 = vmatprep.subr.bf16.mxu0 0
        %348 = vmatpush1.bf16.xpose.msra.mxu0 %v302
        %349 = vmatprep.subr.bf16.mxu0 0
        %350 = vmatpush1.bf16.xpose.msra.mxu0 %v305
        %351 = vmatprep.subr.bf16.mxu0 0
        %352 = vmatpush1.bf16.xpose.msra.mxu0 %v308
        %353 = vmatprep.subr.bf16.mxu0 0
        %354 = vmatpush1.bf16.xpose.msra.mxu0 %v311
        %355 = vmatprep.subr.bf16.mxu0 0
        %356 = vmatpush1.bf16.xpose.msra.mxu0 %v314
        %357 = vmatprep.subr.bf16.mxu0 0
        %358 = vmatpush1.bf16.xpose.msra.mxu0 %v317
        %359 = vmatprep.subr.bf16.mxu0 0
        %360 = vmatpush1.bf16.xpose.msra.mxu0 %v320
        %361 = vmatprep.subr.bf16.mxu0 0
        %362 = vmatpush1.bf16.xpose.msra.mxu0 %v323
        %363 = vmatprep.subr.bf16.mxu0 0
        %364 = vmatpush1.bf16.xpose.msra.mxu0 %v326
        %365 = vmatprep.subr.bf16.mxu0 0
        %366 = vmatpush1.bf16.xpose.msra.mxu0 %v329
        %367 = vmatprep.subr.bf16.mxu0 0
        %368 = vmatpush1.bf16.xpose.msra.mxu0 %v332
        %369 = vmatprep.subr.bf16.mxu0 0
        %370 = vmatpush1.bf16.xpose.msra.mxu0 %v335
        %371 = vmatprep.subr.bf16.mxu0 0
        %372 = vmatpush1.bf16.xpose.msra.mxu0 %v338
        %373 = vmatprep.subr.bf16.mxu0 0
        %374 = vmatpush1.bf16.xpose.msra.mxu0 %v341
        %375 = vmatprep.mubr.bf16.mxu0 0
        %376 = vmatmul.mubr.bf16.gmra.mrb[0].mxu0 %v293
        %v377 = vpop.f32.mrb[0].mxu0
        %v378 = vadd.f32 %v279, %v377
        %v379 = vpop.f32.mrb[0].mxu0
        %v380 = vadd.f32 %v279, %v379
        %v381 = vpop.f32.mrb[0].mxu0
        %v382 = vadd.f32 %v284, %v381
        %v383 = vpop.f32.mrb[0].mxu0
        %v384 = vadd.f32 %v284, %v383
        %385 = vdwg.mxu0
        %v386 = vmax.f32 %v378, 0.0
        %v387 = vmax.f32 %v380, 0.0
        %v388 = vmax.f32 %v382, 0.0
        %v389 = vmax.f32 %v384, 0.0
        %v390 = vld [vmem:[%s2] sm:$0xf]
        %v391 = vld [vmem:[%s2 + $0x4] sm:$0xf]
        %v392 = vpack.c.bf16 %v388, %v386
        %v393 = vpack.c.bf16 %v389, %v387
        %s394 = scalar_lea.vmem %s3, 16
        %v395 = vld [vmem:[%s394] sm:$0xff]
        %v396 = vld [vmem:[%s394 + $0x8] sm:$0xff]
        %398 = vset.pattern.permute.xlu0 0
        %399 = vperm.xlu0 %398, %v395
        %v400 = vpop.permute.xlu0 %399
        %403 = vset.pattern.permute.xlu0 0
        %404 = vperm.xlu0 %403, %v396
        %v405 = vpop.permute.xlu0 %404
        %v409 = vunpack.c.l.b16 %v390
        %v410 = vunpack.c.l.b16 %v391
        %v411 = vpack.c.b16 %v410, %v409
        %vm412 = vcmask 130048
        %v414 = vsel %vm412, %v411, 0
        %416 = vmatprep.subr.bf16.mxu0 %v393
        %417 = vmatpush1.bf16.msra.mxu0 %v392
        %418 = vmatprep.subr.bf16.mxu0 0
        %419 = vmatpush1.bf16.msra.mxu0 0
        %420 = vmatprep.subr.bf16.mxu0 0
        %421 = vmatpush1.bf16.msra.mxu0 0
        %422 = vmatprep.subr.bf16.mxu0 0
        %423 = vmatpush1.bf16.msra.mxu0 0
        %424 = vmatprep.subr.bf16.mxu0 0
        %425 = vmatpush1.bf16.msra.mxu0 0
        %426 = vmatprep.subr.bf16.mxu0 0
        %427 = vmatpush1.bf16.msra.mxu0 0
        %428 = vmatprep.subr.bf16.mxu0 0
        %429 = vmatpush1.bf16.msra.mxu0 0
        %430 = vmatprep.subr.bf16.mxu0 0
        %431 = vmatpush1.bf16.msra.mxu0 0
        %432 = vmatprep.subr.bf16.mxu0 0
        %433 = vmatpush1.bf16.msra.mxu0 0
        %434 = vmatprep.subr.bf16.mxu0 0
        %435 = vmatpush1.bf16.msra.mxu0 0
        %436 = vmatprep.subr.bf16.mxu0 0
        %437 = vmatpush1.bf16.msra.mxu0 0
        %438 = vmatprep.subr.bf16.mxu0 0
        %439 = vmatpush1.bf16.msra.mxu0 0
        %440 = vmatprep.subr.bf16.mxu0 0
        %441 = vmatpush1.bf16.msra.mxu0 0
        %442 = vmatprep.subr.bf16.mxu0 0
        %443 = vmatpush1.bf16.msra.mxu0 0
        %444 = vmatprep.subr.bf16.mxu0 0
        %445 = vmatpush1.bf16.msra.mxu0 0
        %446 = vmatprep.subr.bf16.mxu0 0
        %447 = vmatpush1.bf16.msra.mxu0 0
        %448 = vmatprep.mubr.bf16.mxu0 0
        %449 = vmatmul.mubr.bf16.gmra.mrb[0].mxu0 %v414
        %v450 = vpop.f32.mrb[0].mxu0
        %v451 = vadd.f32 %v400, %v450
        %v452 = vpop.f32.mrb[0].mxu0
        %v453 = vadd.f32 %v400, %v452
        %v454 = vpop.f32.mrb[0].mxu0
        %v455 = vadd.f32 %v405, %v454
        %v456 = vpop.f32.mrb[0].mxu0
        %v457 = vadd.f32 %v405, %v456
        %458 = vdwg.mxu0
        %v459 = vmax.f32 %v451, 0.0
        %v460 = vmax.f32 %v453, 0.0
        %v461 = vmax.f32 %v455, 0.0
        %v462 = vmax.f32 %v457, 0.0
        %s463 = scalar_lea.vmem %s2, 8
        %v464 = vld [vmem:[%s463] sm:$0xf]
        %v465 = vld [vmem:[%s463 + $0x4] sm:$0xf]
        %v466 = vpack.c.bf16 %v461, %v459
        %v467 = vpack.c.bf16 %v462, %v460
        %s468 = scalar_lea.vmem %s3, 32
        %v469 = vld [vmem:[%s468] sm:$0xff]
        %v470 = vld [vmem:[%s468 + $0x8] sm:$0xff]
        %472 = vset.pattern.permute.xlu0 0
        %473 = vperm.xlu0 %472, %v469
        %v474 = vpop.permute.xlu0 %473
        %477 = vset.pattern.permute.xlu0 0
        %478 = vperm.xlu0 %477, %v470
        %v479 = vpop.permute.xlu0 %478
        %v483 = vunpack.c.l.b16 %v464
        %v484 = vunpack.c.l.b16 %v465
        %v485 = vpack.c.b16 %v484, %v483
        %v487 = vsel %vm412, %v485, 0
        %489 = vmatprep.subr.bf16.mxu0 %v467
        %490 = vmatpush1.bf16.msra.mxu0 %v466
        %491 = vmatprep.subr.bf16.mxu0 0
        %492 = vmatpush1.bf16.msra.mxu0 0
        %493 = vmatprep.subr.bf16.mxu0 0
        %494 = vmatpush1.bf16.msra.mxu0 0
        %495 = vmatprep.subr.bf16.mxu0 0
        %496 = vmatpush1.bf16.msra.mxu0 0
        %497 = vmatprep.subr.bf16.mxu0 0
        %498 = vmatpush1.bf16.msra.mxu0 0
        %499 = vmatprep.subr.bf16.mxu0 0
        %500 = vmatpush1.bf16.msra.mxu0 0
        %501 = vmatprep.subr.bf16.mxu0 0
        %502 = vmatpush1.bf16.msra.mxu0 0
        %503 = vmatprep.subr.bf16.mxu0 0
        %504 = vmatpush1.bf16.msra.mxu0 0
        %505 = vmatprep.subr.bf16.mxu0 0
        %506 = vmatpush1.bf16.msra.mxu0 0
        %507 = vmatprep.subr.bf16.mxu0 0
        %508 = vmatpush1.bf16.msra.mxu0 0
        %509 = vmatprep.subr.bf16.mxu0 0
        %510 = vmatpush1.bf16.msra.mxu0 0
        %511 = vmatprep.subr.bf16.mxu0 0
        %512 = vmatpush1.bf16.msra.mxu0 0
        %513 = vmatprep.subr.bf16.mxu0 0
        %514 = vmatpush1.bf16.msra.mxu0 0
        %515 = vmatprep.subr.bf16.mxu0 0
        %516 = vmatpush1.bf16.msra.mxu0 0
        %517 = vmatprep.subr.bf16.mxu0 0
        %518 = vmatpush1.bf16.msra.mxu0 0
        %519 = vmatprep.subr.bf16.mxu0 0
        %520 = vmatpush1.bf16.msra.mxu0 0
        %521 = vmatprep.mubr.bf16.mxu0 0
        %522 = vmatmul.mubr.bf16.gmra.mrb[0].mxu0 %v487
        %v523 = vpop.f32.mrb[0].mxu0
        %v524 = vadd.f32 %v474, %v523
        %v525 = vpop.f32.mrb[0].mxu0
        %v526 = vadd.f32 %v474, %v525
        %v527 = vpop.f32.mrb[0].mxu0
        %v528 = vadd.f32 %v479, %v527
        %v529 = vpop.f32.mrb[0].mxu0
        %v530 = vadd.f32 %v479, %v529
        %531 = vdwg.mxu0
        %v532 = vmax.f32 %v524, 0.0
        %v533 = vmax.f32 %v526, 0.0
        %v534 = vmax.f32 %v528, 0.0
        %v535 = vmax.f32 %v530, 0.0
        %s536 = scalar_lea.vmem %s2, 16
        %v537 = vld [vmem:[%s536] sm:$0xf]
        %v538 = vld [vmem:[%s536 + $0x4] sm:$0xf]
        %v539 = vpack.c.bf16 %v534, %v532
        %v540 = vpack.c.bf16 %v535, %v533
        %s541 = scalar_lea.vmem %s3, 48
        %v542 = vld [vmem:[%s541] sm:$0xff]
        %v543 = vld [vmem:[%s541 + $0x8] sm:$0xff]
        %545 = vset.pattern.permute.xlu0 0
        %546 = vperm.xlu0 %545, %v542
        %v547 = vpop.permute.xlu0 %546
        %550 = vset.pattern.permute.xlu0 0
        %551 = vperm.xlu0 %550, %v543
        %v552 = vpop.permute.xlu0 %551
        %v556 = vunpack.c.l.b16 %v537
        %v557 = vunpack.c.l.b16 %v538
        %v558 = vpack.c.b16 %v557, %v556
        %v560 = vsel %vm412, %v558, 0
        %562 = vmatprep.subr.bf16.mxu0 %v540
        %563 = vmatpush1.bf16.msra.mxu0 %v539
        %564 = vmatprep.subr.bf16.mxu0 0
        %565 = vmatpush1.bf16.msra.mxu0 0
        %566 = vmatprep.subr.bf16.mxu0 0
        %567 = vmatpush1.bf16.msra.mxu0 0
        %568 = vmatprep.subr.bf16.mxu0 0
        %569 = vmatpush1.bf16.msra.mxu0 0
        %570 = vmatprep.subr.bf16.mxu0 0
        %571 = vmatpush1.bf16.msra.mxu0 0
        %572 = vmatprep.subr.bf16.mxu0 0
        %573 = vmatpush1.bf16.msra.mxu0 0
        %574 = vmatprep.subr.bf16.mxu0 0
        %575 = vmatpush1.bf16.msra.mxu0 0
        %576 = vmatprep.subr.bf16.mxu0 0
        %577 = vmatpush1.bf16.msra.mxu0 0
        %578 = vmatprep.subr.bf16.mxu0 0
        %579 = vmatpush1.bf16.msra.mxu0 0
        %580 = vmatprep.subr.bf16.mxu0 0
        %581 = vmatpush1.bf16.msra.mxu0 0
        %582 = vmatprep.subr.bf16.mxu0 0
        %583 = vmatpush1.bf16.msra.mxu0 0
        %584 = vmatprep.subr.bf16.mxu0 0
        %585 = vmatpush1.bf16.msra.mxu0 0
        %586 = vmatprep.subr.bf16.mxu0 0
        %587 = vmatpush1.bf16.msra.mxu0 0
        %588 = vmatprep.subr.bf16.mxu0 0
        %589 = vmatpush1.bf16.msra.mxu0 0
        %590 = vmatprep.subr.bf16.mxu0 0
        %591 = vmatpush1.bf16.msra.mxu0 0
        %592 = vmatprep.subr.bf16.mxu0 0
        %593 = vmatpush1.bf16.msra.mxu0 0
        %594 = vmatprep.mubr.bf16.mxu0 0
        %595 = vmatmul.mubr.bf16.gmra.mrb[0].mxu0 %v560
        %v596 = vpop.f32.mrb[0].mxu0
        %v597 = vadd.f32 %v547, %v596
        %v598 = vpop.f32.mrb[0].mxu0
        %v599 = vadd.f32 %v547, %v598
        %v600 = vpop.f32.mrb[0].mxu0
        %v601 = vadd.f32 %v552, %v600
        %v602 = vpop.f32.mrb[0].mxu0
        %v603 = vadd.f32 %v552, %v602
        %604 = vdwg.mxu0
        %v605 = vmax.f32 %v597, 0.0
        %v606 = vmax.f32 %v599, 0.0
        %v607 = vmax.f32 %v601, 0.0
        %v608 = vmax.f32 %v603, 0.0
        %s609 = scalar_lea.vmem %s2, 24
        %v610 = vld [vmem:[%s609] sm:$0xf]
        %v611 = vld [vmem:[%s609 + $0x4] sm:$0xf]
        %v612 = vpack.c.bf16 %v607, %v605
        %v613 = vpack.c.bf16 %v608, %v606
        %s614 = scalar_lea.vmem %s3, 64
        %v615 = vld [vmem:[%s614] sm:$0xff]
        %v616 = vld [vmem:[%s614 + $0x8] sm:$0xff]
        %618 = vset.pattern.permute.xlu0 0
        %619 = vperm.xlu0 %618, %v615
        %v620 = vpop.permute.xlu0 %619
        %623 = vset.pattern.permute.xlu0 0
        %624 = vperm.xlu0 %623, %v616
        %v625 = vpop.permute.xlu0 %624
        %v628 = vunpack.c.l.b16 %v610
        %v629 = vunpack.c.l.b16 %v611
        %v630 = vpack.c.b16 %v629, %v628
        %v632 = vsel %vm412, %v630, 0
        %634 = vmatprep.subr.bf16.mxu0 %v613
        %635 = vmatpush1.bf16.msra.mxu0 %v612
        %636 = vmatprep.subr.bf16.mxu0 0
        %637 = vmatpush1.bf16.msra.mxu0 0
        %638 = vmatprep.subr.bf16.mxu0 0
        %639 = vmatpush1.bf16.msra.mxu0 0
        %640 = vmatprep.subr.bf16.mxu0 0
        %641 = vmatpush1.bf16.msra.mxu0 0
        %642 = vmatprep.subr.bf16.mxu0 0
        %643 = vmatpush1.bf16.msra.mxu0 0
        %644 = vmatprep.subr.bf16.mxu0 0
        %645 = vmatpush1.bf16.msra.mxu0 0
        %646 = vmatprep.subr.bf16.mxu0 0
        %647 = vmatpush1.bf16.msra.mxu0 0
        %648 = vmatprep.subr.bf16.mxu0 0
        %649 = vmatpush1.bf16.msra.mxu0 0
        %650 = vmatprep.subr.bf16.mxu0 0
        %651 = vmatpush1.bf16.msra.mxu0 0
        %652 = vmatprep.subr.bf16.mxu0 0
        %653 = vmatpush1.bf16.msra.mxu0 0
        %654 = vmatprep.subr.bf16.mxu0 0
        %655 = vmatpush1.bf16.msra.mxu0 0
        %656 = vmatprep.subr.bf16.mxu0 0
        %657 = vmatpush1.bf16.msra.mxu0 0
        %658 = vmatprep.subr.bf16.mxu0 0
        %659 = vmatpush1.bf16.msra.mxu0 0
        %660 = vmatprep.subr.bf16.mxu0 0
        %661 = vmatpush1.bf16.msra.mxu0 0
        %662 = vmatprep.subr.bf16.mxu0 0
        %663 = vmatpush1.bf16.msra.mxu0 0
        %664 = vmatprep.subr.bf16.mxu0 0
        %665 = vmatpush1.bf16.msra.mxu0 0
        %666 = vmatprep.mubr.bf16.mxu0 0
        %667 = vmatmul.mubr.bf16.gmra.mrb[0].mxu0 %v632
        %v668 = vpop.f32.mrb[0].mxu0
        %v669 = vadd.f32 %v620, %v668
        %v670 = vpop.f32.mrb[0].mxu0
        %v671 = vadd.f32 %v620, %v670
        %v672 = vpop.f32.mrb[0].mxu0
        %v673 = vpop.f32.mrb[0].mxu0
        %674 = vdwg.mxu0
        %v675 = vxor.u32 %v669, 2147483648
        %v676 = vxor.u32 %v671, 2147483648
        %v677 = vmul.f32 %v675, 1.442695
        %v678 = vpow.pop %v677
        %v679 = vmul.f32 %v676, 1.442695
        %v680 = vpow.pop %v679
        %v681 = vadd.f32 %v678, 1.0
        %v682 = vadd.f32 %v680, 1.0
        %v683 = vrcp.pop %v681
        %v684 = vmul.f32 1.0, %v683
        %v685 = vrcp.pop %v682
        %v686 = vmul.f32 1.0, %v685
        %v689 = vcombine.low %v684, %v686
        %v691 = vunpack.c.l.s4 1966171168
        %v692 = vunpack.c.0.s8 %v691
        %v693 = vlaneseq
        %v694 = vshrl.u32 %v693, 7
        %v695 = vsub.s32 %v692, %v694
        %v696 = vrot.slane %v689, %v695
        %v698 = vunpack.c.l.s4 1966171168
        %v699 = vunpack.c.0.s8 %v698
        %v700 = vlaneseq
        %v701 = vshrl.u32 %v700, 7
        %v702 = vsub.s32 %v699, %v701
        %v703 = vrot.slane %v696, %v702
        %v705 = vlaneseq
        %vm706 = vcmp.ge.s32.totalorder %v705, 0
        %vm707 = vcmp.lt.s32.totalorder %v705, 256
        %vm708 = vmand %vm706, %vm707
        %709 = vst.msk [vmem:[%s203] sm:$0x3] %vm708, %v703
        %s710 = sand.u32 %s115, 1
        %s711 = scalar_lea.sflag [#allocation3], %s710
        %s712 = sand.u32 %s115, 1
        %s713 = smul.addr %s712, 2
        %s714 = scalar_lea.vmem [#allocation2], %s713
        // Predicated region
        $region37: #{tpu_custom_call.1} parent=35 // pred_check
          %p715 = pneg %p125
        $region38: #{tpu_custom_call.1} parent=35 // pred_check_branch
          %717 = sbr.rel (%p715) target = $region40
        $region39: #{tpu_custom_call.1} parent=35 // pred_region
          %s718 = smul.u32 2, %s18
          %s719 = ssub.s32 3, %s718
          %p720 = scmp.lt.s32.totalorder %s719, 2
          %s721 = scalar_select %p720, %s719, 2
          %s722 = smul.u32 16, %s721
          %s724 = ssub.s32 32, %s722
          %725 = vsyncadd %s711, %s724
          %p726 = scmp.ne.s32.totalorder 0, %s722
          %s727 = smul.addr %s718, 16
          %s728 = scalar_lea.hbm %s4, %s727
          %s729 = sshll.u32 %s721, 4
          %s730 = sshll.u32 %s714, 4
          %s731 = int_to_ptr.vmem [resolvable:$true] %s730
          %733 = dma.vmem_to_hbm [thread:$0]  (%p726), %s731, %s729, %s728, %s711
        $region40: #{tpu_custom_call.1} parent=35 // pred_fallthru
          _
      $region36: #{tpu_custom_call.1} parent=5 // pred_fallthru
        _
      %p734 = scmp.le.s32.totalorder 2, %s13
      // Predicated region
      $region41: #{tpu_custom_call.1} parent=5 // pred_check
        %p735 = pneg %p734
      $region42: #{tpu_custom_call.1} parent=5 // pred_check_branch
        %737 = sbr.rel (%p735) target = $region44
      $region43: #{tpu_custom_call.1} parent=5 // pred_region
        %s738 = ssub.s32 %s13, 2
        // Predicated region
        $region45: #{tpu_custom_call.1} parent=43 // pred_check
          %p739 = pneg %p131
        $region46: #{tpu_custom_call.1} parent=43 // pred_check_branch
          %741 = sbr.rel (%p739) target = $region48
        $region47: #{tpu_custom_call.1} parent=43 // pred_region
          %s742 = sand.u32 %s116, 1
          %s743 = scalar_lea.sflag [#allocation3], %s742
          %s744 = sand.u32 %s116, 1
          %s745 = smul.addr %s744, 2
          %s746 = scalar_lea.vmem [#allocation2], %s745
          %747 = dma.done %s743, 32
        $region48: #{tpu_custom_call.1} parent=43 // pred_fallthru
          _
      $region44: #{tpu_custom_call.1} parent=5 // pred_fallthru
        _
    $region6: #{tpu_custom_call.1} parent=1 // loop_footer
      %s17 = sadd.s32 1, %s13
    $region7: #{tpu_custom_call.1} parent=1 // loop_footer_branch
      %12 = sbr.rel target = $region3
    $region8: #{tpu_custom_call.1} parent=1 // loop_exit
      _
    %748 = vsyncpa [#allocation3], 1
    %s749 = scalar_lea.sflag [#allocation3], 1
    %750 = vsyncpa %s749, 1

</llo_original>
